<compile_context>
chip_gen: v5e
topology: v5e:2x2
jax: 0.10.0
libtpu: 0.0.40
codegen_flags: <defaults>
</compile_context>

<pallas_src>
import functools

import jax
import jax.numpy as jnp
from jax.experimental import pallas as pl
from jax.experimental.pallas import tpu as pltpu

_LN_EPS = 1e-5


def _layer_norm(x, g, b):
    mu = jnp.mean(x, axis=-1, keepdims=True)
    xc = x - mu
    var = jnp.mean(xc * xc, axis=-1, keepdims=True)
    return xc * jax.lax.rsqrt(var + _LN_EPS) * g + b


def _forward_math(x2d, wproj, bproj, g1, be1, wqkv, bqkv, wo, bo,
                  g2, be2, wf1, bf1, wf2, bf2, wtail, btail,
                  *, batch, seq, d_model, heads, head_dim):
    # ---------------- Encoder ----------------
    h = jnp.dot(x2d, wproj, preferred_element_type=jnp.float32) + bproj    # (BS, D)

    # --- self-attention block (residual) ---
    ln1h = _layer_norm(h, g1, be1)
    qkv = jnp.dot(ln1h, wqkv, preferred_element_type=jnp.float32) + bqkv   # (BS, 3D)
    qkv3 = qkv.reshape(batch, seq, 3 * d_model)
    q = qkv3[:, :, :d_model]                     # already scaled by head_dim^-0.5
    k = qkv3[:, :, d_model:2 * d_model]
    v = qkv3[:, :, 2 * d_model:]

    head_outs = []
    for hd in range(heads):
        sl = slice(hd * head_dim, (hd + 1) * head_dim)
        qh, kh, vh = q[:, :, sl], k[:, :, sl], v[:, :, sl]
        s = jnp.einsum("bqd,bkd->bqk", qh, kh,
                       preferred_element_type=jnp.float32)
        s = s - jnp.max(s, axis=-1, keepdims=True)
        p = jnp.exp(s)
        p = p * pl.reciprocal(jnp.sum(p, axis=-1, keepdims=True), approx=True)
        head_outs.append(jnp.einsum("bqk,bkd->bqd", p, vh,
                                    preferred_element_type=jnp.float32))
    attn = jnp.concatenate(head_outs, axis=-1).reshape(batch * seq, d_model)
    h = h + jnp.dot(attn, wo, preferred_element_type=jnp.float32) + bo     # residual

    # --- feed-forward block (residual) ---
    ln2h = _layer_norm(h, g2, be2)
    f = jnp.dot(ln2h, wf1, preferred_element_type=jnp.float32) + bf1
    f = jnp.maximum(f, 0.0)
    f = jnp.dot(f, wf2, preferred_element_type=jnp.float32) + bf2
    h = h + f

    # --- mean-pool over seq + fused (outp -> regressor -> denorm) tail ---
    pooled = jnp.sum(h.reshape(batch, seq, d_model), axis=1) * (1.0 / seq)  # (B, D)
    return jnp.dot(pooled, wtail, preferred_element_type=jnp.float32) + btail


def residual_model_kernel(*refs, batch, seq, d_model, heads, head_dim):
    o_ref = refs[-1]
    args = [r[...] for r in refs[:-1]]
    o_ref[...] = _forward_math(*args, batch=batch, seq=seq, d_model=d_model,
                               heads=heads, head_dim=head_dim)


def deterministic_residual_forward(x, params, y_mean, y_std, heads):
    batch, seq, in_dim = x.shape
    d_model = params["wproj"].shape[1]
    assert d_model % heads == 0
    head_dim = d_model // heads
    scale = float(head_dim) ** -0.5

    # -------- parameter-only folds (plain-JAX glue, f32, no input dependence) --
    wqkv = jnp.concatenate(
        [params["wq"] * scale, params["wk"], params["wv"]], axis=1)        # (D, 3D)
    bqkv = jnp.concatenate(
        [params["bq"] * scale, params["bk"], params["bv"]], axis=1)        # (1, 3D)
    wreg_s = params["wreg"] * y_std                                         # (D, 1)
    wtail = params["wout"] @ wreg_s                                         # (D, 1)
    btail = params["bout"] @ wreg_s + params["breg"] * y_std + y_mean       # (1, 1)

    x2d = x.reshape(batch * seq, in_dim)

    vmem_args = [
        x2d,
        params["wproj"], params["bproj"],
        params["g1"], params["be1"],
        wqkv, bqkv,
        params["wo"], params["bo"],
        params["g2"], params["be2"],
        params["wf1"], params["bf1"],
        params["wf2"], params["bf2"],
        wtail, btail,
    ]

    kernel = functools.partial(residual_model_kernel, batch=batch, seq=seq,
                               d_model=d_model, heads=heads, head_dim=head_dim)

    return pl.pallas_call(
        kernel,
        out_shape=jax.ShapeDtypeStruct((batch, 1), jnp.float32),
        in_specs=[pl.BlockSpec(memory_space=pltpu.MemorySpace.VMEM)]
                 * len(vmem_args),
        out_specs=pl.BlockSpec(memory_space=pltpu.MemorySpace.VMEM),
    )(*vmem_args)


def reference_forward(x, params, y_mean, y_std, heads):
    """Pure-JAX reference mirroring the PyTorch eval forward (unfused)."""
    d_model = params["wproj"].shape[1]
    head_dim = d_model // heads
    scale = float(head_dim) ** -0.5

    h = jnp.einsum("bsi,io->bso", x, params["wproj"]) + params["bproj"]
    ln1h = _layer_norm(h, params["g1"], params["be1"])
    q = jnp.einsum("bsd,do->bso", ln1h, params["wq"]) + params["bq"]
    k = jnp.einsum("bsd,do->bso", ln1h, params["wk"]) + params["bk"]
    v = jnp.einsum("bsd,do->bso", ln1h, params["wv"]) + params["bv"]
    outs = []
    for hd in range(heads):
        sl = slice(hd * head_dim, (hd + 1) * head_dim)
        s = jnp.einsum("bqd,bkd->bqk", q[..., sl], k[..., sl]) * scale
        p = jax.nn.softmax(s, axis=-1)
        outs.append(jnp.einsum("bqk,bkd->bqd", p, v[..., sl]))
    a = jnp.concatenate(outs, axis=-1)
    h = h + jnp.einsum("bsd,do->bso", a, params["wo"]) + params["bo"]
    ln2h = _layer_norm(h, params["g2"], params["be2"])
    f = jnp.maximum(
        jnp.einsum("bsd,dh->bsh", ln2h, params["wf1"]) + params["bf1"], 0.0)
    f = jnp.einsum("bsh,hd->bsd", f, params["wf2"]) + params["bf2"]
    h = h + f
    z = jnp.mean(h, axis=1) @ params["wout"] + params["bout"]
    pred_norm = z @ params["wreg"] + params["breg"]
    return pred_norm * y_std + y_mean


if __name__ == "__main__":
    B, S, IN, D, HID, HEADS = 2, 8, 6, 32, 128, 2

    key = jax.random.PRNGKey(0)
    ks = jax.random.split(key, 12)

    def nrm(k, shape, s=0.1):
        return (jax.random.normal(k, shape, jnp.float32) * s).astype(jnp.float32)

    # Weights are pre-transposed to (in, out) relative to torch.nn.Linear (out, in).
    params = dict(
        wproj=nrm(ks[0], (IN, D)), bproj=nrm(ks[1], (1, D)),
        g1=jnp.ones((1, D), jnp.float32), be1=jnp.zeros((1, D), jnp.float32),
        wq=nrm(ks[2], (D, D)), bq=jnp.zeros((1, D), jnp.float32),
        wk=nrm(ks[3], (D, D)), bk=jnp.zeros((1, D), jnp.float32),
        wv=nrm(ks[4], (D, D)), bv=jnp.zeros((1, D), jnp.float32),
        wo=nrm(ks[5], (D, D)), bo=jnp.zeros((1, D), jnp.float32),
        g2=jnp.ones((1, D), jnp.float32), be2=jnp.zeros((1, D), jnp.float32),
        wf1=nrm(ks[6], (D, HID)), bf1=jnp.zeros((1, HID), jnp.float32),
        wf2=nrm(ks[7], (HID, D)), bf2=jnp.zeros((1, D), jnp.float32),
        wout=nrm(ks[8], (D, D)), bout=jnp.zeros((1, D), jnp.float32),
        wreg=nrm(ks[9], (D, 1)), breg=jnp.zeros((1, 1), jnp.float32),
    )
    y_mean, y_std = 1.5, 2.0

    x = jax.random.normal(ks[10], (B, S, IN), jnp.float32)

    out = deterministic_residual_forward(x, params, y_mean, y_std, heads=HEADS)
    out = jax.block_until_ready(out)

    ref = reference_forward(x, params, y_mean, y_std, heads=HEADS)
    assert out.shape == (B, 1), out.shape
    assert bool(jnp.all(jnp.isfinite(out)))
    assert jnp.allclose(out, ref, atol=2e-3, rtol=2e-3), (out, ref)

    print("KERNEL_OK")
</pallas_src>

<mosaic_0001>
module attributes {stable_mosaic.version = 11 : i64} {
  func.func @residual_model_kernel(%arg0: memref<16x6xf32, #tpu.memory_space<vmem>>, %arg1: memref<6x32xf32, #tpu.memory_space<vmem>>, %arg2: memref<1x32xf32, #tpu.memory_space<vmem>>, %arg3: memref<1x32xf32, #tpu.memory_space<vmem>>, %arg4: memref<1x32xf32, #tpu.memory_space<vmem>>, %arg5: memref<32x96xf32, #tpu.memory_space<vmem>>, %arg6: memref<1x96xf32, #tpu.memory_space<vmem>>, %arg7: memref<32x32xf32, #tpu.memory_space<vmem>>, %arg8: memref<1x32xf32, #tpu.memory_space<vmem>>, %arg9: memref<1x32xf32, #tpu.memory_space<vmem>>, %arg10: memref<1x32xf32, #tpu.memory_space<vmem>>, %arg11: memref<32x128xf32, #tpu.memory_space<vmem>>, %arg12: memref<1x128xf32, #tpu.memory_space<vmem>>, %arg13: memref<128x32xf32, #tpu.memory_space<vmem>>, %arg14: memref<1x32xf32, #tpu.memory_space<vmem>>, %arg15: memref<32x1xf32, #tpu.memory_space<vmem>>, %arg16: memref<1x1xf32, #tpu.memory_space<vmem>>, %arg17: memref<2x1xf32, #tpu.memory_space<vmem>>) attributes {dimension_semantics = [], scalar_prefetch = 0 : i64, scratch_operands = 0 : i64, tpu.core_type = #tpu.core_type<tc>} {
    %c0 = arith.constant 0 : index
    %c0_0 = arith.constant 0 : index
    %0 = vector.load %arg0[%c0, %c0_0] : memref<16x6xf32, #tpu.memory_space<vmem>>, vector<16x6xf32>
    %c0_1 = arith.constant 0 : index
    %c0_2 = arith.constant 0 : index
    %1 = vector.load %arg1[%c0_1, %c0_2] : memref<6x32xf32, #tpu.memory_space<vmem>>, vector<6x32xf32>
    %c0_3 = arith.constant 0 : index
    %c0_4 = arith.constant 0 : index
    %2 = vector.load %arg2[%c0_3, %c0_4] : memref<1x32xf32, #tpu.memory_space<vmem>>, vector<1x32xf32>
    %c0_5 = arith.constant 0 : index
    %c0_6 = arith.constant 0 : index
    %3 = vector.load %arg3[%c0_5, %c0_6] : memref<1x32xf32, #tpu.memory_space<vmem>>, vector<1x32xf32>
    %c0_7 = arith.constant 0 : index
    %c0_8 = arith.constant 0 : index
    %4 = vector.load %arg4[%c0_7, %c0_8] : memref<1x32xf32, #tpu.memory_space<vmem>>, vector<1x32xf32>
    %c0_9 = arith.constant 0 : index
    %c0_10 = arith.constant 0 : index
    %5 = vector.load %arg5[%c0_9, %c0_10] : memref<32x96xf32, #tpu.memory_space<vmem>>, vector<32x96xf32>
    %c0_11 = arith.constant 0 : index
    %c0_12 = arith.constant 0 : index
    %6 = vector.load %arg6[%c0_11, %c0_12] : memref<1x96xf32, #tpu.memory_space<vmem>>, vector<1x96xf32>
    %c0_13 = arith.constant 0 : index
    %c0_14 = arith.constant 0 : index
    %7 = vector.load %arg7[%c0_13, %c0_14] : memref<32x32xf32, #tpu.memory_space<vmem>>, vector<32x32xf32>
    %c0_15 = arith.constant 0 : index
    %c0_16 = arith.constant 0 : index
    %8 = vector.load %arg8[%c0_15, %c0_16] : memref<1x32xf32, #tpu.memory_space<vmem>>, vector<1x32xf32>
    %c0_17 = arith.constant 0 : index
    %c0_18 = arith.constant 0 : index
    %9 = vector.load %arg9[%c0_17, %c0_18] : memref<1x32xf32, #tpu.memory_space<vmem>>, vector<1x32xf32>
    %c0_19 = arith.constant 0 : index
    %c0_20 = arith.constant 0 : index
    %10 = vector.load %arg10[%c0_19, %c0_20] : memref<1x32xf32, #tpu.memory_space<vmem>>, vector<1x32xf32>
    %c0_21 = arith.constant 0 : index
    %c0_22 = arith.constant 0 : index
    %11 = vector.load %arg11[%c0_21, %c0_22] : memref<32x128xf32, #tpu.memory_space<vmem>>, vector<32x128xf32>
    %c0_23 = arith.constant 0 : index
    %c0_24 = arith.constant 0 : index
    %12 = vector.load %arg12[%c0_23, %c0_24] : memref<1x128xf32, #tpu.memory_space<vmem>>, vector<1x128xf32>
    %c0_25 = arith.constant 0 : index
    %c0_26 = arith.constant 0 : index
    %13 = vector.load %arg13[%c0_25, %c0_26] : memref<128x32xf32, #tpu.memory_space<vmem>>, vector<128x32xf32>
    %c0_27 = arith.constant 0 : index
    %c0_28 = arith.constant 0 : index
    %14 = vector.load %arg14[%c0_27, %c0_28] : memref<1x32xf32, #tpu.memory_space<vmem>>, vector<1x32xf32>
    %c0_29 = arith.constant 0 : index
    %c0_30 = arith.constant 0 : index
    %15 = vector.load %arg15[%c0_29, %c0_30] : memref<32x1xf32, #tpu.memory_space<vmem>>, vector<32x1xf32>
    %c0_31 = arith.constant 0 : index
    %c0_32 = arith.constant 0 : index
    %16 = vector.load %arg16[%c0_31, %c0_32] : memref<1x1xf32, #tpu.memory_space<vmem>>, vector<1x1xf32>
    %cst = arith.constant dense<0.000000e+00> : vector<16x32xf32>
    %17 = tpu.matmul %0, %1, %cst {dimension_numbers = #tpu.dot_dimension_numbers<[1], [0], [0], [1], [0, 0, 1, 1], [], []>} : vector<16x6xf32>, vector<6x32xf32>, vector<16x32xf32> -> vector<16x32xf32>
    %18 = vector.broadcast %2 : vector<1x32xf32> to vector<16x32xf32>
    %19 = arith.addf %17, %18 : vector<16x32xf32>
    %cst_33 = arith.constant dense<0.000000e+00> : vector<16xf32>
    %20 = vector.multi_reduction <add>, %19, %cst_33 [1] : vector<16x32xf32> to vector<16xf32>
    %21 = vector.shape_cast %20 : vector<16xf32> to vector<16x1xf32>
    %cst_34 = arith.constant 3.200000e+01 : f32
    %22 = vector.broadcast %cst_34 : f32 to vector<16x1xf32>
    %23 = arith.divf %21, %22 : vector<16x1xf32>
    %24 = vector.broadcast %23 : vector<16x1xf32> to vector<16x32xf32>
    %25 = arith.subf %19, %24 : vector<16x32xf32>
    %26 = arith.mulf %25, %25 : vector<16x32xf32>
    %cst_35 = arith.constant dense<0.000000e+00> : vector<16xf32>
    %27 = vector.multi_reduction <add>, %26, %cst_35 [1] : vector<16x32xf32> to vector<16xf32>
    %28 = vector.shape_cast %27 : vector<16xf32> to vector<16x1xf32>
    %cst_36 = arith.constant 3.200000e+01 : f32
    %29 = vector.broadcast %cst_36 : f32 to vector<16x1xf32>
    %30 = arith.divf %28, %29 : vector<16x1xf32>
    %cst_37 = arith.constant 9.99999974E-6 : f32
    %31 = vector.broadcast %cst_37 : f32 to vector<16x1xf32>
    %32 = arith.addf %30, %31 : vector<16x1xf32>
    %33 = math.rsqrt %32 : vector<16x1xf32>
    %34 = vector.broadcast %33 : vector<16x1xf32> to vector<16x32xf32>
    %35 = arith.mulf %25, %34 : vector<16x32xf32>
    %36 = vector.broadcast %3 : vector<1x32xf32> to vector<16x32xf32>
    %37 = arith.mulf %35, %36 : vector<16x32xf32>
    %38 = vector.broadcast %4 : vector<1x32xf32> to vector<16x32xf32>
    %39 = arith.addf %37, %38 : vector<16x32xf32>
    %cst_38 = arith.constant dense<0.000000e+00> : vector<16x96xf32>
    %40 = tpu.matmul %39, %5, %cst_38 {dimension_numbers = #tpu.dot_dimension_numbers<[1], [0], [0], [1], [0, 0, 1, 1], [], []>} : vector<16x32xf32>, vector<32x96xf32>, vector<16x96xf32> -> vector<16x96xf32>
    %41 = vector.broadcast %6 : vector<1x96xf32> to vector<16x96xf32>
    %42 = arith.addf %40, %41 : vector<16x96xf32>
    %43 = vector.shape_cast %42 : vector<16x96xf32> to vector<2x8x96xf32>
    %44 = vector.extract_strided_slice %43 {offsets = [0, 0, 0], sizes = [2, 8, 32], strides = [1, 1, 1]} : vector<2x8x96xf32> to vector<2x8x32xf32>
    %45 = vector.extract_strided_slice %43 {offsets = [0, 0, 32], sizes = [2, 8, 32], strides = [1, 1, 1]} : vector<2x8x96xf32> to vector<2x8x32xf32>
    %46 = vector.extract_strided_slice %43 {offsets = [0, 0, 64], sizes = [2, 8, 32], strides = [1, 1, 1]} : vector<2x8x96xf32> to vector<2x8x32xf32>
    %47 = vector.extract_strided_slice %44 {offsets = [0, 0, 0], sizes = [2, 8, 16], strides = [1, 1, 1]} : vector<2x8x32xf32> to vector<2x8x16xf32>
    %48 = vector.extract_strided_slice %45 {offsets = [0, 0, 0], sizes = [2, 8, 16], strides = [1, 1, 1]} : vector<2x8x32xf32> to vector<2x8x16xf32>
    %49 = vector.extract_strided_slice %46 {offsets = [0, 0, 0], sizes = [2, 8, 16], strides = [1, 1, 1]} : vector<2x8x32xf32> to vector<2x8x16xf32>
    "tpu.trace_start"() <{level = 10 : i32, message = "bqd,bkd->bqk"}> : () -> ()
    %cst_39 = arith.constant dense<0.000000e+00> : vector<2x8x8xf32>
    %50 = tpu.matmul %47, %48, %cst_39 {dimension_numbers = #tpu.dot_dimension_numbers<[2], [2], [1], [1], [0, 0, 0, 1, 1, 1], [0], [0]>} : vector<2x8x16xf32>, vector<2x8x16xf32>, vector<2x8x8xf32> -> vector<2x8x8xf32>
    "tpu.trace_stop"() : () -> ()
    %cst_40 = arith.constant dense<0xFF800000> : vector<2x8xf32>
    %51 = vector.multi_reduction <maximumf>, %50, %cst_40 [2] : vector<2x8x8xf32> to vector<2x8xf32>
    %52 = vector.shape_cast %51 : vector<2x8xf32> to vector<2x8x1xf32>
    %53 = vector.broadcast %52 : vector<2x8x1xf32> to vector<2x8x8xf32>
    %54 = arith.subf %50, %53 : vector<2x8x8xf32>
    %55 = math.exp %54 : vector<2x8x8xf32>
    %cst_41 = arith.constant dense<0.000000e+00> : vector<2x8xf32>
    %56 = vector.multi_reduction <add>, %55, %cst_41 [2] : vector<2x8x8xf32> to vector<2x8xf32>
    %57 = vector.shape_cast %56 : vector<2x8xf32> to vector<2x8x1xf32>
    %58 = tpu.reciprocal %57 {approx = true} : vector<2x8x1xf32> -> vector<2x8x1xf32>
    %59 = vector.broadcast %58 : vector<2x8x1xf32> to vector<2x8x8xf32>
    %60 = arith.mulf %55, %59 : vector<2x8x8xf32>
    "tpu.trace_start"() <{level = 10 : i32, message = "bqk,bkd->bqd"}> : () -> ()
    %cst_42 = arith.constant dense<0.000000e+00> : vector<2x8x16xf32>
    %61 = tpu.matmul %60, %49, %cst_42 {dimension_numbers = #tpu.dot_dimension_numbers<[2], [1], [1], [2], [0, 0, 0, 1, 1, 2], [0], [0]>} : vector<2x8x8xf32>, vector<2x8x16xf32>, vector<2x8x16xf32> -> vector<2x8x16xf32>
    "tpu.trace_stop"() : () -> ()
    %62 = vector.extract_strided_slice %44 {offsets = [0, 0, 16], sizes = [2, 8, 16], strides = [1, 1, 1]} : vector<2x8x32xf32> to vector<2x8x16xf32>
    %63 = vector.extract_strided_slice %45 {offsets = [0, 0, 16], sizes = [2, 8, 16], strides = [1, 1, 1]} : vector<2x8x32xf32> to vector<2x8x16xf32>
    %64 = vector.extract_strided_slice %46 {offsets = [0, 0, 16], sizes = [2, 8, 16], strides = [1, 1, 1]} : vector<2x8x32xf32> to vector<2x8x16xf32>
    "tpu.trace_start"() <{level = 10 : i32, message = "bqd,bkd->bqk"}> : () -> ()
    %cst_43 = arith.constant dense<0.000000e+00> : vector<2x8x8xf32>
    %65 = tpu.matmul %62, %63, %cst_43 {dimension_numbers = #tpu.dot_dimension_numbers<[2], [2], [1], [1], [0, 0, 0, 1, 1, 1], [0], [0]>} : vector<2x8x16xf32>, vector<2x8x16xf32>, vector<2x8x8xf32> -> vector<2x8x8xf32>
    "tpu.trace_stop"() : () -> ()
    %cst_44 = arith.constant dense<0xFF800000> : vector<2x8xf32>
    %66 = vector.multi_reduction <maximumf>, %65, %cst_44 [2] : vector<2x8x8xf32> to vector<2x8xf32>
    %67 = vector.shape_cast %66 : vector<2x8xf32> to vector<2x8x1xf32>
    %68 = vector.broadcast %67 : vector<2x8x1xf32> to vector<2x8x8xf32>
    %69 = arith.subf %65, %68 : vector<2x8x8xf32>
    %70 = math.exp %69 : vector<2x8x8xf32>
    %cst_45 = arith.constant dense<0.000000e+00> : vector<2x8xf32>
    %71 = vector.multi_reduction <add>, %70, %cst_45 [2] : vector<2x8x8xf32> to vector<2x8xf32>
    %72 = vector.shape_cast %71 : vector<2x8xf32> to vector<2x8x1xf32>
    %73 = tpu.reciprocal %72 {approx = true} : vector<2x8x1xf32> -> vector<2x8x1xf32>
    %74 = vector.broadcast %73 : vector<2x8x1xf32> to vector<2x8x8xf32>
    %75 = arith.mulf %70, %74 : vector<2x8x8xf32>
    "tpu.trace_start"() <{level = 10 : i32, message = "bqk,bkd->bqd"}> : () -> ()
    %cst_46 = arith.constant dense<0.000000e+00> : vector<2x8x16xf32>
    %76 = tpu.matmul %75, %64, %cst_46 {dimension_numbers = #tpu.dot_dimension_numbers<[2], [1], [1], [2], [0, 0, 0, 1, 1, 2], [0], [0]>} : vector<2x8x8xf32>, vector<2x8x16xf32>, vector<2x8x16xf32> -> vector<2x8x16xf32>
    "tpu.trace_stop"() : () -> ()
    %77 = tpu.concatenate %61, %76 in 2 : vector<2x8x16xf32>, vector<2x8x16xf32> -> vector<2x8x32xf32>
    %78 = vector.shape_cast %77 : vector<2x8x32xf32> to vector<16x32xf32>
    %cst_47 = arith.constant dense<0.000000e+00> : vector<16x32xf32>
    %79 = tpu.matmul %78, %7, %cst_47 {dimension_numbers = #tpu.dot_dimension_numbers<[1], [0], [0], [1], [0, 0, 1, 1], [], []>} : vector<16x32xf32>, vector<32x32xf32>, vector<16x32xf32> -> vector<16x32xf32>
    %80 = arith.addf %19, %79 : vector<16x32xf32>
    %81 = vector.broadcast %8 : vector<1x32xf32> to vector<16x32xf32>
    %82 = arith.addf %80, %81 : vector<16x32xf32>
    %cst_48 = arith.constant dense<0.000000e+00> : vector<16xf32>
    %83 = vector.multi_reduction <add>, %82, %cst_48 [1] : vector<16x32xf32> to vector<16xf32>
    %84 = vector.shape_cast %83 : vector<16xf32> to vector<16x1xf32>
    %cst_49 = arith.constant 3.200000e+01 : f32
    %85 = vector.broadcast %cst_49 : f32 to vector<16x1xf32>
    %86 = arith.divf %84, %85 : vector<16x1xf32>
    %87 = vector.broadcast %86 : vector<16x1xf32> to vector<16x32xf32>
    %88 = arith.subf %82, %87 : vector<16x32xf32>
    %89 = arith.mulf %88, %88 : vector<16x32xf32>
    %cst_50 = arith.constant dense<0.000000e+00> : vector<16xf32>
    %90 = vector.multi_reduction <add>, %89, %cst_50 [1] : vector<16x32xf32> to vector<16xf32>
    %91 = vector.shape_cast %90 : vector<16xf32> to vector<16x1xf32>
    %cst_51 = arith.constant 3.200000e+01 : f32
    %92 = vector.broadcast %cst_51 : f32 to vector<16x1xf32>
    %93 = arith.divf %91, %92 : vector<16x1xf32>
    %cst_52 = arith.constant 9.99999974E-6 : f32
    %94 = vector.broadcast %cst_52 : f32 to vector<16x1xf32>
    %95 = arith.addf %93, %94 : vector<16x1xf32>
    %96 = math.rsqrt %95 : vector<16x1xf32>
    %97 = vector.broadcast %96 : vector<16x1xf32> to vector<16x32xf32>
    %98 = arith.mulf %88, %97 : vector<16x32xf32>
    %99 = vector.broadcast %9 : vector<1x32xf32> to vector<16x32xf32>
    %100 = arith.mulf %98, %99 : vector<16x32xf32>
    %101 = vector.broadcast %10 : vector<1x32xf32> to vector<16x32xf32>
    %102 = arith.addf %100, %101 : vector<16x32xf32>
    %cst_53 = arith.constant dense<0.000000e+00> : vector<16x128xf32>
    %103 = tpu.matmul %102, %11, %cst_53 {dimension_numbers = #tpu.dot_dimension_numbers<[1], [0], [0], [1], [0, 0, 1, 1], [], []>} : vector<16x32xf32>, vector<32x128xf32>, vector<16x128xf32> -> vector<16x128xf32>
    %104 = vector.broadcast %12 : vector<1x128xf32> to vector<16x128xf32>
    %105 = arith.addf %103, %104 : vector<16x128xf32>
    %cst_54 = arith.constant 0.000000e+00 : f32
    %106 = vector.broadcast %cst_54 : f32 to vector<16x128xf32>
    %107 = arith.maximumf %105, %106 : vector<16x128xf32>
    %cst_55 = arith.constant dense<0.000000e+00> : vector<16x32xf32>
    %108 = tpu.matmul %107, %13, %cst_55 {dimension_numbers = #tpu.dot_dimension_numbers<[1], [0], [0], [1], [0, 0, 1, 1], [], []>} : vector<16x128xf32>, vector<128x32xf32>, vector<16x32xf32> -> vector<16x32xf32>
    %109 = vector.broadcast %14 : vector<1x32xf32> to vector<16x32xf32>
    %110 = arith.addf %108, %109 : vector<16x32xf32>
    %111 = arith.addf %82, %110 : vector<16x32xf32>
    %112 = vector.shape_cast %111 : vector<16x32xf32> to vector<2x8x32xf32>
    %cst_56 = arith.constant dense<0.000000e+00> : vector<2x32xf32>
    %113 = vector.multi_reduction <add>, %112, %cst_56 [1] : vector<2x8x32xf32> to vector<2x32xf32>
    %cst_57 = arith.constant 1.250000e-01 : f32
    %114 = vector.broadcast %cst_57 : f32 to vector<2x32xf32>
    %115 = arith.mulf %113, %114 : vector<2x32xf32>
    %cst_58 = arith.constant dense<0.000000e+00> : vector<2x1xf32>
    %116 = tpu.matmul %115, %15, %cst_58 {dimension_numbers = #tpu.dot_dimension_numbers<[1], [0], [0], [1], [0, 0, 1, 1], [], []>} : vector<2x32xf32>, vector<32x1xf32>, vector<2x1xf32> -> vector<2x1xf32>
    %117 = vector.broadcast %16 : vector<1x1xf32> to vector<2x1xf32>
    %118 = arith.addf %116, %117 : vector<2x1xf32>
    %c0_59 = arith.constant 0 : index
    %c0_60 = arith.constant 0 : index
    %119 = vector.load %arg17[%c0_59, %c0_60] : memref<2x1xf32, #tpu.memory_space<vmem>>, vector<2x1xf32>
    tpu.vector_store %arg17[%c0_59, %c0_60], %118 {strides = array<i32>} : memref<2x1xf32, #tpu.memory_space<vmem>>, vector<2x1xf32>,
    return
  }
}

</mosaic_0001>

<llo_original>
// kernel: tpu_custom_call.1
$region0: #{tpu_custom_call.1}
  #allocation0 [shape = 'u32[]', space=smem, size = 0x4, offset = 0x4, fixed_abs, tag = 'smem constant byte address 0x4 - core index']
  #allocation1 [shape = 'u32[72,128]{1,0:T(1,128)}', space=vmem, size = 0x9000, scoped, tag = 'internal scratch']
  #allocation2 [shape = 'f32[1,1]{1,0:T(1,128)S(1)}', space=vmem, size = 0x200, scoped, tag = 'scoped memory for tpu_custom_call.1']
  %s0 = inlined_call_operand.vmem [shape: f32[16,6], index: 0, kind: input, shape index: {}]
  %s1 = inlined_call_operand.vmem [shape: f32[6,32], index: 1, kind: input, shape index: {}]
  %s2 = inlined_call_operand.vmem [shape: f32[1,32], index: 2, kind: input, shape index: {}]
  %s3 = inlined_call_operand.vmem [shape: f32[1,32], index: 3, kind: input, shape index: {}]
  %s4 = inlined_call_operand.vmem [shape: f32[1,32], index: 4, kind: input, shape index: {}]
  %s5 = inlined_call_operand.vmem [shape: f32[32,96], index: 5, kind: input, shape index: {}]
  %s6 = inlined_call_operand.vmem [shape: f32[1,96], index: 6, kind: input, shape index: {}]
  %s7 = inlined_call_operand.vmem [shape: f32[32,32], index: 7, kind: input, shape index: {}]
  %s8 = inlined_call_operand.vmem [shape: f32[1,32], index: 8, kind: input, shape index: {}]
  %s9 = inlined_call_operand.vmem [shape: f32[1,32], index: 9, kind: input, shape index: {}]
  %s10 = inlined_call_operand.vmem [shape: f32[1,32], index: 10, kind: input, shape index: {}]
  %s11 = inlined_call_operand.vmem [shape: f32[32,128], index: 11, kind: input, shape index: {}]
  %s12 = inlined_call_operand.vmem [shape: f32[1,128], index: 12, kind: input, shape index: {}]
  %s13 = inlined_call_operand.vmem [shape: f32[128,32], index: 13, kind: input, shape index: {}]
  %s14 = inlined_call_operand.vmem [shape: f32[1,32], index: 14, kind: input, shape index: {}]
  %s15 = inlined_call_operand.vmem [shape: f32[32,1], index: 15, kind: input, shape index: {}]
  %s16 = inlined_call_operand.<no memory space> [shape: f32[1,1], index: 16, kind: input, shape index: {}]
  %s17 = inlined_call_operand.vmem [shape: f32[2,1], index: 17, kind: output, shape index: {}]
  %s18 = sld [smem:[#allocation0]]
  $region78: #{tpu_custom_call.1} parent=0
    _
  %s20 = ssub.s32 1, %s18
  %s21 = scalar_select 0, %s20, %s18
  %v22 = vstv %s16
  %23 = vst [vmem:[#allocation2] sm:$0x1] %v22
  // Predicated region
  $region2: #{tpu_custom_call.1} parent=0 // pred_check
    _
  $region3: #{tpu_custom_call.1} parent=0 // pred_check_branch
    %25 = sbr.rel (0) target = $region5
  $region4: #{tpu_custom_call.1} parent=0 // pred_region
    _
  $region5: #{tpu_custom_call.1} parent=0 // pred_fallthru
    _
  // Predicated region
  $region6: #{tpu_custom_call.1} parent=0 // pred_check
    _
  $region7: #{tpu_custom_call.1} parent=0 // pred_check_branch
    %27 = sbr.rel (0) target = $region9
  $region8: #{tpu_custom_call.1} parent=0 // pred_region
    _
  $region9: #{tpu_custom_call.1} parent=0 // pred_fallthru
    _
  // Predicated region
  $region10: #{tpu_custom_call.1} parent=0 // pred_check
    _
  $region11: #{tpu_custom_call.1} parent=0 // pred_check_branch
    %29 = sbr.rel (0) target = $region13
  $region12: #{tpu_custom_call.1} parent=0 // pred_region
    _
  $region13: #{tpu_custom_call.1} parent=0 // pred_fallthru
    _
  // Predicated region
  $region14: #{tpu_custom_call.1} parent=0 // pred_check
    _
  $region15: #{tpu_custom_call.1} parent=0 // pred_check_branch
    %31 = sbr.rel (0) target = $region17
  $region16: #{tpu_custom_call.1} parent=0 // pred_region
    _
  $region17: #{tpu_custom_call.1} parent=0 // pred_fallthru
    _
  // Predicated region
  $region18: #{tpu_custom_call.1} parent=0 // pred_check
    _
  $region19: #{tpu_custom_call.1} parent=0 // pred_check_branch
    %33 = sbr.rel (0) target = $region21
  $region20: #{tpu_custom_call.1} parent=0 // pred_region
    _
  $region21: #{tpu_custom_call.1} parent=0 // pred_fallthru
    _
  // Predicated region
  $region22: #{tpu_custom_call.1} parent=0 // pred_check
    _
  $region23: #{tpu_custom_call.1} parent=0 // pred_check_branch
    %35 = sbr.rel (0) target = $region25
  $region24: #{tpu_custom_call.1} parent=0 // pred_region
    _
  $region25: #{tpu_custom_call.1} parent=0 // pred_fallthru
    _
  // Predicated region
  $region26: #{tpu_custom_call.1} parent=0 // pred_check
    _
  $region27: #{tpu_custom_call.1} parent=0 // pred_check_branch
    %37 = sbr.rel (0) target = $region29
  $region28: #{tpu_custom_call.1} parent=0 // pred_region
    _
  $region29: #{tpu_custom_call.1} parent=0 // pred_fallthru
    _
  // Predicated region
  $region30: #{tpu_custom_call.1} parent=0 // pred_check
    _
  $region31: #{tpu_custom_call.1} parent=0 // pred_check_branch
    %39 = sbr.rel (0) target = $region33
  $region32: #{tpu_custom_call.1} parent=0 // pred_region
    _
  $region33: #{tpu_custom_call.1} parent=0 // pred_fallthru
    _
  // Predicated region
  $region34: #{tpu_custom_call.1} parent=0 // pred_check
    _
  $region35: #{tpu_custom_call.1} parent=0 // pred_check_branch
    %41 = sbr.rel (0) target = $region37
  $region36: #{tpu_custom_call.1} parent=0 // pred_region
    _
  $region37: #{tpu_custom_call.1} parent=0 // pred_fallthru
    _
  // Predicated region
  $region38: #{tpu_custom_call.1} parent=0 // pred_check
    _
  $region39: #{tpu_custom_call.1} parent=0 // pred_check_branch
    %43 = sbr.rel (0) target = $region41
  $region40: #{tpu_custom_call.1} parent=0 // pred_region
    _
  $region41: #{tpu_custom_call.1} parent=0 // pred_fallthru
    _
  // Predicated region
  $region42: #{tpu_custom_call.1} parent=0 // pred_check
    _
  $region43: #{tpu_custom_call.1} parent=0 // pred_check_branch
    %45 = sbr.rel (0) target = $region45
  $region44: #{tpu_custom_call.1} parent=0 // pred_region
    _
  $region45: #{tpu_custom_call.1} parent=0 // pred_fallthru
    _
  // Predicated region
  $region46: #{tpu_custom_call.1} parent=0 // pred_check
    _
  $region47: #{tpu_custom_call.1} parent=0 // pred_check_branch
    %47 = sbr.rel (0) target = $region49
  $region48: #{tpu_custom_call.1} parent=0 // pred_region
    _
  $region49: #{tpu_custom_call.1} parent=0 // pred_fallthru
    _
  // Predicated region
  $region50: #{tpu_custom_call.1} parent=0 // pred_check
    _
  $region51: #{tpu_custom_call.1} parent=0 // pred_check_branch
    %49 = sbr.rel (0) target = $region53
  $region52: #{tpu_custom_call.1} parent=0 // pred_region
    _
  $region53: #{tpu_custom_call.1} parent=0 // pred_fallthru
    _
  // Predicated region
  $region54: #{tpu_custom_call.1} parent=0 // pred_check
    _
  $region55: #{tpu_custom_call.1} parent=0 // pred_check_branch
    %51 = sbr.rel (0) target = $region57
  $region56: #{tpu_custom_call.1} parent=0 // pred_region
    _
  $region57: #{tpu_custom_call.1} parent=0 // pred_fallthru
    _
  // Predicated region
  $region58: #{tpu_custom_call.1} parent=0 // pred_check
    _
  $region59: #{tpu_custom_call.1} parent=0 // pred_check_branch
    %53 = sbr.rel (0) target = $region61
  $region60: #{tpu_custom_call.1} parent=0 // pred_region
    _
  $region61: #{tpu_custom_call.1} parent=0 // pred_fallthru
    _
  // Predicated region
  $region62: #{tpu_custom_call.1} parent=0 // pred_check
    _
  $region63: #{tpu_custom_call.1} parent=0 // pred_check_branch
    %55 = sbr.rel (0) target = $region65
  $region64: #{tpu_custom_call.1} parent=0 // pred_region
    _
  $region65: #{tpu_custom_call.1} parent=0 // pred_fallthru
    _
  // Predicated region
  $region66: #{tpu_custom_call.1} parent=0 // pred_check
    _
  $region67: #{tpu_custom_call.1} parent=0 // pred_check_branch
    %57 = sbr.rel (0) target = $region69
  $region68: #{tpu_custom_call.1} parent=0 // pred_region
    _
  $region69: #{tpu_custom_call.1} parent=0 // pred_fallthru
    _
  %v58 = vld [vmem:[%s0] sm:$0xff]
  %v59 = vld [vmem:[%s0 + $0x8] sm:$0xff]
  %v60 = vld [vmem:[%s1] sm:$0x3f]
  %v61 = vld [vmem:[%s2] sm:$0x1]
  %v62 = vld [vmem:[%s3] sm:$0x1]
  %v63 = vld [vmem:[%s4] sm:$0x1]
  %v64 = vld [vmem:[%s5] sm:$0xff]
  %v65 = vld [vmem:[%s5 + $0x8] sm:$0xff]
  %v66 = vld [vmem:[%s5 + $0x10] sm:$0xff]
  %v67 = vld [vmem:[%s5 + $0x18] sm:$0xff]
  %v68 = vld [vmem:[%s6] sm:$0x1]
  %v69 = vld [vmem:[%s7] sm:$0xff]
  %v70 = vld [vmem:[%s7 + $0x8] sm:$0xff]
  %v71 = vld [vmem:[%s7 + $0x10] sm:$0xff]
  %v72 = vld [vmem:[%s7 + $0x18] sm:$0xff]
  %v73 = vld [vmem:[%s8] sm:$0x1]
  %v74 = vld [vmem:[%s9] sm:$0x1]
  %v75 = vld [vmem:[%s10] sm:$0x1]
  %v76 = vld [vmem:[%s11] sm:$0xff]
  %v77 = vld [vmem:[%s11 + $0x8] sm:$0xff]
  %v78 = vld [vmem:[%s11 + $0x10] sm:$0xff]
  %v79 = vld [vmem:[%s11 + $0x18] sm:$0xff]
  %v80 = vld [vmem:[%s12] sm:$0x1]
  %v81 = vld [vmem:[%s13] sm:$0xff]
  %v82 = vld [vmem:[%s13 + $0x8] sm:$0xff]
  %v83 = vld [vmem:[%s13 + $0x10] sm:$0xff]
  %v84 = vld [vmem:[%s13 + $0x18] sm:$0xff]
  %v85 = vld [vmem:[%s13 + $0x20] sm:$0xff]
  %v86 = vld [vmem:[%s13 + $0x28] sm:$0xff]
  %v87 = vld [vmem:[%s13 + $0x30] sm:$0xff]
  %v88 = vld [vmem:[%s13 + $0x38] sm:$0xff]
  %v89 = vld [vmem:[%s13 + $0x40] sm:$0xff]
  %v90 = vld [vmem:[%s13 + $0x48] sm:$0xff]
  %v91 = vld [vmem:[%s13 + $0x50] sm:$0xff]
  %v92 = vld [vmem:[%s13 + $0x58] sm:$0xff]
  %v93 = vld [vmem:[%s13 + $0x60] sm:$0xff]
  %v94 = vld [vmem:[%s13 + $0x68] sm:$0xff]
  %v95 = vld [vmem:[%s13 + $0x70] sm:$0xff]
  %v96 = vld [vmem:[%s13 + $0x78] sm:$0xff]
  %v97 = vld [vmem:[%s14] sm:$0x1]
  %v98 = vld [vmem:[%s15] sm:$0xff]
  %v99 = vld [vmem:[%s15 + $0x8] sm:$0xff]
  %v100 = vld [vmem:[%s15 + $0x10] sm:$0xff]
  %v101 = vld [vmem:[%s15 + $0x18] sm:$0xff]
  %v102 = vld [vmem:[#allocation2] sm:$0x1]
  %v104 = vperm.slane %v61, 0
  %vm106 = vcmask 48128
  %v108 = vsel %vm106, %v58, 0
  %v111 = vsel %vm106, %v59, 0
  %vm113 = vcmask 1045504
  %v115 = vsel %vm113, %v60, 0
  %117 = vmatpush.msra.mxu0 0.0
  %118 = vmatpush.msra.mxu0 0.0
  %119 = vmatpush.msra.mxu0 0.0
  %120 = vmatpush.msra.mxu0 0.0
  %121 = vmatpush.msra.mxu0 0.0
  %122 = vmatpush.msra.mxu0 0.0
  %123 = vmatpush.msra.mxu0 0.0
  %124 = vmatpush.msra.mxu0 0.0
  %125 = vmatpush.msra.mxu0 0.0
  %126 = vmatpush.msra.mxu0 0.0
  %127 = vmatpush.msra.mxu0 0.0
  %128 = vmatpush.msra.mxu0 0.0
  %129 = vmatpush.msra.mxu0 0.0
  %130 = vmatpush.msra.mxu0 0.0
  %131 = vmatpush.msra.mxu0 0.0
  %132 = vmatpush.msra.mxu0 %v115
  %133 = vmatmul.f32.gmra.mxu0 %v108
  %v134 = vpop.f32.mrf.mxu0
  %v135 = vadd.f32 %v104, %v134
  %136 = vmatmul.f32.gmra.mxu0 %v111
  %v137 = vpop.f32.mrf.mxu0
  %v138 = vadd.f32 %v104, %v137
  %139 = vdwg.mxu0
  %vm140 = vcmask 261120
  %v141 = vsel %vm140, %v135, 0.0
  %142 = vadd.xlane.f32.xlu0 %v141
  %v143 = vpop.xlane.xlu0 %142
  %v144 = vsel %vm140, %v138, 0.0
  %145 = vadd.xlane.f32.xlu0 %v144
  %v146 = vpop.xlane.xlu0 %145
  %v147 = vrcp.pop 32.0
  %v148 = vmul.f32 32.0, %v147
  %v149 = vsub.f32 1.0, %v148
  %v150 = vmul.f32 %v147, %v149
  %v151 = vadd.f32 %v147, %v150
  %vm152 = vweird.f32 %v147
  %v153 = vsel %vm152, %v147, %v151
  %v154 = vmul.f32 %v143, %v153
  %v155 = vmul.f32 %v146, %v153
  %v156 = vsub.f32 %v135, %v154
  %v157 = vsub.f32 %v138, %v155
  %v158 = vmul.f32 %v156, %v156
  %v159 = vmul.f32 %v157, %v157
  %v160 = vsel %vm140, %v158, 0.0
  %161 = vadd.xlane.f32.xlu0 %v160
  %v162 = vpop.xlane.xlu0 %161
  %v163 = vsel %vm140, %v159, 0.0
  %164 = vadd.xlane.f32.xlu0 %v163
  %v165 = vpop.xlane.xlu0 %164
  %v166 = vmul.f32 %v162, %v153
  %v167 = vmul.f32 %v165, %v153
  %v168 = vadd.f32 %v166, 1e-05
  %v169 = vadd.f32 %v167, 1e-05
  %v170 = vrsqrt.pop %v168
  %v171 = vmul.f32 %v170, %v168
  %v172 = vmul.f32 %v171, %v170
  %v173 = vmul.f32 0.5, %v172
  %v174 = vsub.f32 1.5, %v173
  %v175 = vmul.f32 %v170, %v174
  %vm176 = vweird.f32 %v168
  %vm177 = vweird.f32 %v170
  %vm178 = vmor %vm176, %vm177
  %v179 = vsel %vm178, %v170, %v175
  %v180 = vrsqrt.pop %v169
  %v181 = vmul.f32 %v180, %v169
  %v182 = vmul.f32 %v181, %v180
  %v183 = vmul.f32 0.5, %v182
  %v184 = vsub.f32 1.5, %v183
  %v185 = vmul.f32 %v180, %v184
  %vm186 = vweird.f32 %v169
  %vm187 = vweird.f32 %v180
  %vm188 = vmor %vm186, %vm187
  %v189 = vsel %vm188, %v180, %v185
  %v190 = vmul.f32 %v156, %v179
  %v191 = vmul.f32 %v157, %v189
  %v193 = vperm.slane %v62, 0
  %v195 = vmul.f32 %v190, %v193
  %v196 = vmul.f32 %v191, %v193
  %v198 = vperm.slane %v63, 0
  %v200 = vadd.f32 %v195, %v198
  %v201 = vadd.f32 %v196, %v198
  %v203 = vperm.slane %v68, 0
  %v206 = vsel %vm140, %v200, 0
  %v209 = vsel %vm140, %v201, 0
  %211 = vmatpush.msra.mxu0 0.0
  %212 = vmatpush.msra.mxu0 0.0
  %213 = vmatpush.msra.mxu0 0.0
  %214 = vmatpush.msra.mxu0 0.0
  %215 = vmatpush.msra.mxu0 0.0
  %216 = vmatpush.msra.mxu0 0.0
  %217 = vmatpush.msra.mxu0 0.0
  %218 = vmatpush.msra.mxu0 0.0
  %219 = vmatpush.msra.mxu0 0.0
  %220 = vmatpush.msra.mxu0 0.0
  %221 = vmatpush.msra.mxu0 0.0
  %222 = vmatpush.msra.mxu0 0.0
  %223 = vmatpush.msra.mxu0 %v67
  %224 = vmatpush.msra.mxu0 %v66
  %225 = vmatpush.msra.mxu0 %v65
  %226 = vmatpush.msra.mxu0 %v64
  %227 = vmatmul.f32.gmra.mxu0 %v206
  %v228 = vpop.f32.mrf.mxu0
  %v229 = vadd.f32 %v203, %v228
  %230 = vmatmul.f32.gmra.mxu0 %v209
  %v231 = vpop.f32.mrf.mxu0
  %v232 = vadd.f32 %v203, %v231
  %233 = vdwg.mxu0
  %235 = vrot.lane.b32.xlu0 %v229, 96
  %v236 = vpop.permute.xlu0 %235
  %vm237 = vcmask 130048
  %v238 = vsel %vm237, %v229, 0
  %v240 = vsel %vm237, %v236, 0
  %242 = vmatpush.xpose.msra.mxu0 0.0
  %243 = vmatpush.xpose.msra.mxu0 0.0
  %244 = vmatpush.xpose.msra.mxu0 0.0
  %245 = vmatpush.xpose.msra.mxu0 0.0
  %246 = vmatpush.xpose.msra.mxu0 0.0
  %247 = vmatpush.xpose.msra.mxu0 0.0
  %248 = vmatpush.xpose.msra.mxu0 0.0
  %249 = vmatpush.xpose.msra.mxu0 0.0
  %250 = vmatpush.xpose.msra.mxu0 0.0
  %251 = vmatpush.xpose.msra.mxu0 0.0
  %252 = vmatpush.xpose.msra.mxu0 0.0
  %253 = vmatpush.xpose.msra.mxu0 0.0
  %254 = vmatpush.xpose.msra.mxu0 0.0
  %255 = vmatpush.xpose.msra.mxu0 0.0
  %256 = vmatpush.xpose.msra.mxu0 0.0
  %257 = vmatpush.xpose.msra.mxu0 %v240
  %258 = vmatmul.f32.gmra.mxu0 %v238
  %v259 = vpop.f32.mrf.mxu0
  %v260 = vadd.f32 0.0, %v259
  %261 = vdwg.mxu0
  %263 = vrot.lane.b32.xlu0 %v232, 96
  %v264 = vpop.permute.xlu0 %263
  %v265 = vsel %vm237, %v232, 0
  %v267 = vsel %vm237, %v264, 0
  %269 = vmatpush.xpose.msra.mxu0 0.0
  %270 = vmatpush.xpose.msra.mxu0 0.0
  %271 = vmatpush.xpose.msra.mxu0 0.0
  %272 = vmatpush.xpose.msra.mxu0 0.0
  %273 = vmatpush.xpose.msra.mxu0 0.0
  %274 = vmatpush.xpose.msra.mxu0 0.0
  %275 = vmatpush.xpose.msra.mxu0 0.0
  %276 = vmatpush.xpose.msra.mxu0 0.0
  %277 = vmatpush.xpose.msra.mxu0 0.0
  %278 = vmatpush.xpose.msra.mxu0 0.0
  %279 = vmatpush.xpose.msra.mxu0 0.0
  %280 = vmatpush.xpose.msra.mxu0 0.0
  %281 = vmatpush.xpose.msra.mxu0 0.0
  %282 = vmatpush.xpose.msra.mxu0 0.0
  %283 = vmatpush.xpose.msra.mxu0 0.0
  %284 = vmatpush.xpose.msra.mxu0 %v267
  %285 = vmatmul.f32.gmra.mxu0 %v265
  %v286 = vpop.f32.mrf.mxu0
  %v287 = vadd.f32 0.0, %v286
  %288 = vdwg.mxu0
  %vm289 = vcmask 64512
  %v290 = vsel %vm289, %v260, -inf
  %291 = vmax.xlane.f32.xlu0 %v290
  %v292 = vpop.xlane.xlu0 %291
  %v293 = vsel %vm289, %v287, -inf
  %294 = vmax.xlane.f32.xlu0 %v293
  %v295 = vpop.xlane.xlu0 %294
  %v296 = vsub.f32 %v260, %v292
  %v297 = vsub.f32 %v287, %v295
  %v298 = vmul.f32 %v296, 1.442695
  %v299 = vpow.pop %v298
  %v300 = vmul.f32 %v297, 1.442695
  %v301 = vpow.pop %v300
  %v302 = vsel %vm289, %v299, 0.0
  %303 = vadd.xlane.f32.xlu0 %v302
  %v304 = vpop.xlane.xlu0 %303
  %v305 = vsel %vm289, %v301, 0.0
  %306 = vadd.xlane.f32.xlu0 %v305
  %v307 = vpop.xlane.xlu0 %306
  %v308 = vrcp.pop %v304
  %v309 = vrcp.pop %v307
  %v310 = vmul.f32 %v299, %v308
  %v311 = vmul.f32 %v301, %v309
  %312 = vrot.lane.b32.xlu0 %v229, 64
  %v313 = vpop.permute.xlu0 %312
  %v316 = vsel %vm289, %v310, 0
  %318 = vmatpush.msra.mxu0 0.0
  %319 = vmatpush.msra.mxu0 0.0
  %320 = vmatpush.msra.mxu0 0.0
  %321 = vmatpush.msra.mxu0 0.0
  %322 = vmatpush.msra.mxu0 0.0
  %323 = vmatpush.msra.mxu0 0.0
  %324 = vmatpush.msra.mxu0 0.0
  %325 = vmatpush.msra.mxu0 0.0
  %326 = vmatpush.msra.mxu0 0.0
  %327 = vmatpush.msra.mxu0 0.0
  %328 = vmatpush.msra.mxu0 0.0
  %329 = vmatpush.msra.mxu0 0.0
  %330 = vmatpush.msra.mxu0 0.0
  %331 = vmatpush.msra.mxu0 0.0
  %332 = vmatpush.msra.mxu0 0.0
  %333 = vmatpush.msra.mxu0 %v313
  %334 = vmatmul.f32.gmra.mxu0 %v316
  %v335 = vpop.f32.mrf.mxu0
  %v336 = vadd.f32 0.0, %v335
  %337 = vdwg.mxu0
  %338 = vrot.lane.b32.xlu0 %v232, 64
  %v339 = vpop.permute.xlu0 %338
  %v342 = vsel %vm289, %v311, 0
  %344 = vmatpush.msra.mxu0 0.0
  %345 = vmatpush.msra.mxu0 0.0
  %346 = vmatpush.msra.mxu0 0.0
  %347 = vmatpush.msra.mxu0 0.0
  %348 = vmatpush.msra.mxu0 0.0
  %349 = vmatpush.msra.mxu0 0.0
  %350 = vmatpush.msra.mxu0 0.0
  %351 = vmatpush.msra.mxu0 0.0
  %352 = vmatpush.msra.mxu0 0.0
  %353 = vmatpush.msra.mxu0 0.0
  %354 = vmatpush.msra.mxu0 0.0
  %355 = vmatpush.msra.mxu0 0.0
  %356 = vmatpush.msra.mxu0 0.0
  %357 = vmatpush.msra.mxu0 0.0
  %358 = vmatpush.msra.mxu0 0.0
  %359 = vmatpush.msra.mxu0 %v339
  %360 = vmatmul.f32.gmra.mxu0 %v342
  %v361 = vpop.f32.mrf.mxu0
  %v362 = vadd.f32 0.0, %v361
  %363 = vdwg.mxu0
  %364 = vrot.lane.b32.xlu0 %v229, 112
  %v365 = vpop.permute.xlu0 %364
  %366 = vrot.lane.b32.xlu0 %v229, 80
  %v367 = vpop.permute.xlu0 %366
  %v368 = vsel %vm237, %v365, 0
  %v370 = vsel %vm237, %v367, 0
  %372 = vmatpush.xpose.msra.mxu0 0.0
  %373 = vmatpush.xpose.msra.mxu0 0.0
  %374 = vmatpush.xpose.msra.mxu0 0.0
  %375 = vmatpush.xpose.msra.mxu0 0.0
  %376 = vmatpush.xpose.msra.mxu0 0.0
  %377 = vmatpush.xpose.msra.mxu0 0.0
  %378 = vmatpush.xpose.msra.mxu0 0.0
  %379 = vmatpush.xpose.msra.mxu0 0.0
  %380 = vmatpush.xpose.msra.mxu0 0.0
  %381 = vmatpush.xpose.msra.mxu0 0.0
  %382 = vmatpush.xpose.msra.mxu0 0.0
  %383 = vmatpush.xpose.msra.mxu0 0.0
  %384 = vmatpush.xpose.msra.mxu0 0.0
  %385 = vmatpush.xpose.msra.mxu0 0.0
  %386 = vmatpush.xpose.msra.mxu0 0.0
  %387 = vmatpush.xpose.msra.mxu0 %v370
  %388 = vmatmul.f32.gmra.mxu0 %v368
  %v389 = vpop.f32.mrf.mxu0
  %v390 = vadd.f32 0.0, %v389
  %391 = vdwg.mxu0
  %392 = vrot.lane.b32.xlu0 %v232, 112
  %v393 = vpop.permute.xlu0 %392
  %394 = vrot.lane.b32.xlu0 %v232, 80
  %v395 = vpop.permute.xlu0 %394
  %v396 = vsel %vm237, %v393, 0
  %v398 = vsel %vm237, %v395, 0
  %400 = vmatpush.xpose.msra.mxu0 0.0
  %401 = vmatpush.xpose.msra.mxu0 0.0
  %402 = vmatpush.xpose.msra.mxu0 0.0
  %403 = vmatpush.xpose.msra.mxu0 0.0
  %404 = vmatpush.xpose.msra.mxu0 0.0
  %405 = vmatpush.xpose.msra.mxu0 0.0
  %406 = vmatpush.xpose.msra.mxu0 0.0
  %407 = vmatpush.xpose.msra.mxu0 0.0
  %408 = vmatpush.xpose.msra.mxu0 0.0
  %409 = vmatpush.xpose.msra.mxu0 0.0
  %410 = vmatpush.xpose.msra.mxu0 0.0
  %411 = vmatpush.xpose.msra.mxu0 0.0
  %412 = vmatpush.xpose.msra.mxu0 0.0
  %413 = vmatpush.xpose.msra.mxu0 0.0
  %414 = vmatpush.xpose.msra.mxu0 0.0
  %415 = vmatpush.xpose.msra.mxu0 %v398
  %416 = vmatmul.f32.gmra.mxu0 %v396
  %v417 = vpop.f32.mrf.mxu0
  %v418 = vadd.f32 0.0, %v417
  %419 = vdwg.mxu0
  %v420 = vsel %vm289, %v390, -inf
  %421 = vmax.xlane.f32.xlu0 %v420
  %v422 = vpop.xlane.xlu0 %421
  %v423 = vsel %vm289, %v418, -inf
  %424 = vmax.xlane.f32.xlu0 %v423
  %v425 = vpop.xlane.xlu0 %424
  %v426 = vsub.f32 %v390, %v422
  %v427 = vsub.f32 %v418, %v425
  %v428 = vmul.f32 %v426, 1.442695
  %v429 = vpow.pop %v428
  %v430 = vmul.f32 %v427, 1.442695
  %v431 = vpow.pop %v430
  %v432 = vsel %vm289, %v429, 0.0
  %433 = vadd.xlane.f32.xlu0 %v432
  %v434 = vpop.xlane.xlu0 %433
  %v435 = vsel %vm289, %v431, 0.0
  %436 = vadd.xlane.f32.xlu0 %v435
  %v437 = vpop.xlane.xlu0 %436
  %v438 = vrcp.pop %v434
  %v439 = vrcp.pop %v437
  %v440 = vmul.f32 %v429, %v438
  %v441 = vmul.f32 %v431, %v439
  %442 = vrot.lane.b32.xlu0 %v229, 48
  %v443 = vpop.permute.xlu0 %442
  %v446 = vsel %vm289, %v440, 0
  %448 = vmatpush.msra.mxu0 0.0
  %449 = vmatpush.msra.mxu0 0.0
  %450 = vmatpush.msra.mxu0 0.0
  %451 = vmatpush.msra.mxu0 0.0
  %452 = vmatpush.msra.mxu0 0.0
  %453 = vmatpush.msra.mxu0 0.0
  %454 = vmatpush.msra.mxu0 0.0
  %455 = vmatpush.msra.mxu0 0.0
  %456 = vmatpush.msra.mxu0 0.0
  %457 = vmatpush.msra.mxu0 0.0
  %458 = vmatpush.msra.mxu0 0.0
  %459 = vmatpush.msra.mxu0 0.0
  %460 = vmatpush.msra.mxu0 0.0
  %461 = vmatpush.msra.mxu0 0.0
  %462 = vmatpush.msra.mxu0 0.0
  %463 = vmatpush.msra.mxu0 %v443
  %464 = vmatmul.f32.gmra.mxu0 %v446
  %v465 = vpop.f32.mrf.mxu0
  %v466 = vadd.f32 0.0, %v465
  %467 = vdwg.mxu0
  %468 = vrot.lane.b32.xlu0 %v232, 48
  %v469 = vpop.permute.xlu0 %468
  %v472 = vsel %vm289, %v441, 0
  %474 = vmatpush.msra.mxu0 0.0
  %475 = vmatpush.msra.mxu0 0.0
  %476 = vmatpush.msra.mxu0 0.0
  %477 = vmatpush.msra.mxu0 0.0
  %478 = vmatpush.msra.mxu0 0.0
  %479 = vmatpush.msra.mxu0 0.0
  %480 = vmatpush.msra.mxu0 0.0
  %481 = vmatpush.msra.mxu0 0.0
  %482 = vmatpush.msra.mxu0 0.0
  %483 = vmatpush.msra.mxu0 0.0
  %484 = vmatpush.msra.mxu0 0.0
  %485 = vmatpush.msra.mxu0 0.0
  %486 = vmatpush.msra.mxu0 0.0
  %487 = vmatpush.msra.mxu0 0.0
  %488 = vmatpush.msra.mxu0 0.0
  %489 = vmatpush.msra.mxu0 %v469
  %490 = vmatmul.f32.gmra.mxu0 %v472
  %v491 = vpop.f32.mrf.mxu0
  %v492 = vadd.f32 0.0, %v491
  %493 = vdwg.mxu0
  %496 = vrot.lane.b32.xlu0 %v466, 16
  %v497 = vpop.permute.xlu0 %496
  %498 = vrot.lane.b32.xlu0 %v492, 16
  %v499 = vpop.permute.xlu0 %498
  %v502 = vsel %vm237, %v336, %v497
  %v503 = vsel %vm237, %v362, %v499
  %v505 = vsel %vm140, %v502, 0
  %v508 = vsel %vm140, %v503, 0
  %510 = vmatpush.msra.mxu0 0.0
  %511 = vmatpush.msra.mxu0 0.0
  %512 = vmatpush.msra.mxu0 0.0
  %513 = vmatpush.msra.mxu0 0.0
  %514 = vmatpush.msra.mxu0 0.0
  %515 = vmatpush.msra.mxu0 0.0
  %516 = vmatpush.msra.mxu0 0.0
  %517 = vmatpush.msra.mxu0 0.0
  %518 = vmatpush.msra.mxu0 0.0
  %519 = vmatpush.msra.mxu0 0.0
  %520 = vmatpush.msra.mxu0 0.0
  %521 = vmatpush.msra.mxu0 0.0
  %522 = vmatpush.msra.mxu0 %v72
  %523 = vmatpush.msra.mxu0 %v71
  %524 = vmatpush.msra.mxu0 %v70
  %525 = vmatpush.msra.mxu0 %v69
  %526 = vmatmul.f32.gmra.mxu0 %v505
  %v527 = vpop.f32.mrf.mxu0
  %v528 = vadd.f32 0.0, %v527
  %529 = vmatmul.f32.gmra.mxu0 %v508
  %v530 = vpop.f32.mrf.mxu0
  %v531 = vadd.f32 0.0, %v530
  %532 = vdwg.mxu0
  %v533 = vadd.f32 %v135, %v528
  %v534 = vadd.f32 %v138, %v531
  %v536 = vperm.slane %v73, 0
  %v538 = vadd.f32 %v533, %v536
  %v539 = vadd.f32 %v534, %v536
  %v540 = vsel %vm140, %v538, 0.0
  %541 = vadd.xlane.f32.xlu0 %v540
  %v542 = vpop.xlane.xlu0 %541
  %v543 = vsel %vm140, %v539, 0.0
  %544 = vadd.xlane.f32.xlu0 %v543
  %v545 = vpop.xlane.xlu0 %544
  %v546 = vmul.f32 %v542, %v153
  %v547 = vmul.f32 %v545, %v153
  %v548 = vsub.f32 %v538, %v546
  %v549 = vsub.f32 %v539, %v547
  %v550 = vmul.f32 %v548, %v548
  %v551 = vmul.f32 %v549, %v549
  %v552 = vsel %vm140, %v550, 0.0
  %553 = vadd.xlane.f32.xlu0 %v552
  %v554 = vpop.xlane.xlu0 %553
  %v555 = vsel %vm140, %v551, 0.0
  %556 = vadd.xlane.f32.xlu0 %v555
  %v557 = vpop.xlane.xlu0 %556
  %v558 = vmul.f32 %v554, %v153
  %v559 = vmul.f32 %v557, %v153
  %v560 = vadd.f32 %v558, 1e-05
  %v561 = vadd.f32 %v559, 1e-05
  %v562 = vrsqrt.pop %v560
  %v563 = vmul.f32 %v562, %v560
  %v564 = vmul.f32 %v563, %v562
  %v565 = vmul.f32 0.5, %v564
  %v566 = vsub.f32 1.5, %v565
  %v567 = vmul.f32 %v562, %v566
  %vm568 = vweird.f32 %v560
  %vm569 = vweird.f32 %v562
  %vm570 = vmor %vm568, %vm569
  %v571 = vsel %vm570, %v562, %v567
  %v572 = vrsqrt.pop %v561
  %v573 = vmul.f32 %v572, %v561
  %v574 = vmul.f32 %v573, %v572
  %v575 = vmul.f32 0.5, %v574
  %v576 = vsub.f32 1.5, %v575
  %v577 = vmul.f32 %v572, %v576
  %vm578 = vweird.f32 %v561
  %vm579 = vweird.f32 %v572
  %vm580 = vmor %vm578, %vm579
  %v581 = vsel %vm580, %v572, %v577
  %v582 = vmul.f32 %v548, %v571
  %v583 = vmul.f32 %v549, %v581
  %v585 = vperm.slane %v74, 0
  %v587 = vmul.f32 %v582, %v585
  %v588 = vmul.f32 %v583, %v585
  %v590 = vperm.slane %v75, 0
  %v592 = vadd.f32 %v587, %v590
  %v593 = vadd.f32 %v588, %v590
  %v595 = vperm.slane %v80, 0
  %v598 = vsel %vm140, %v592, 0
  %v601 = vsel %vm140, %v593, 0
  %603 = vmatpush.msra.mxu0 0.0
  %604 = vmatpush.msra.mxu0 0.0
  %605 = vmatpush.msra.mxu0 0.0
  %606 = vmatpush.msra.mxu0 0.0
  %607 = vmatpush.msra.mxu0 0.0
  %608 = vmatpush.msra.mxu0 0.0
  %609 = vmatpush.msra.mxu0 0.0
  %610 = vmatpush.msra.mxu0 0.0
  %611 = vmatpush.msra.mxu0 0.0
  %612 = vmatpush.msra.mxu0 0.0
  %613 = vmatpush.msra.mxu0 0.0
  %614 = vmatpush.msra.mxu0 0.0
  %615 = vmatpush.msra.mxu0 %v79
  %616 = vmatpush.msra.mxu0 %v78
  %617 = vmatpush.msra.mxu0 %v77
  %618 = vmatpush.msra.mxu0 %v76
  %619 = vmatmul.f32.gmra.mxu0 %v598
  %v620 = vpop.f32.mrf.mxu0
  %v621 = vadd.f32 %v595, %v620
  %622 = vmatmul.f32.gmra.mxu0 %v601
  %v623 = vpop.f32.mrf.mxu0
  %v624 = vadd.f32 %v595, %v623
  %625 = vdwg.mxu0
  %v626 = vmax.f32 %v621, 0.0
  %v627 = vmax.f32 %v624, 0.0
  %v629 = vperm.slane %v97, 0
  %631 = vmatpush.msra.mxu0 %v96
  %632 = vmatpush.msra.mxu0 %v95
  %633 = vmatpush.msra.mxu0 %v94
  %634 = vmatpush.msra.mxu0 %v93
  %635 = vmatpush.msra.mxu0 %v92
  %636 = vmatpush.msra.mxu0 %v91
  %637 = vmatpush.msra.mxu0 %v90
  %638 = vmatpush.msra.mxu0 %v89
  %639 = vmatpush.msra.mxu0 %v88
  %640 = vmatpush.msra.mxu0 %v87
  %641 = vmatpush.msra.mxu0 %v86
  %642 = vmatpush.msra.mxu0 %v85
  %643 = vmatpush.msra.mxu0 %v84
  %644 = vmatpush.msra.mxu0 %v83
  %645 = vmatpush.msra.mxu0 %v82
  %646 = vmatpush.msra.mxu0 %v81
  %647 = vmatmul.f32.gmra.mxu0 %v626
  %v648 = vpop.f32.mrf.mxu0
  %v649 = vadd.f32 %v629, %v648
  %650 = vmatmul.f32.gmra.mxu0 %v627
  %v651 = vpop.f32.mrf.mxu0
  %v652 = vadd.f32 %v629, %v651
  %653 = vdwg.mxu0
  %v654 = vadd.f32 %v538, %v649
  %v655 = vadd.f32 %v539, %v652
  %v656 = vsel %vm140, %v654, 0.0
  %v657 = vrot.slane %v656, 4
  %v658 = vadd.f32 %v656, %v657
  %v659 = vrot.slane %v658, 2
  %v660 = vadd.f32 %v658, %v659
  %v661 = vrot.slane %v660, 1
  %v662 = vadd.f32 %v660, %v661
  %v663 = vsel %vm140, %v655, 0.0
  %v664 = vrot.slane %v663, 4
  %v665 = vadd.f32 %v663, %v664
  %v666 = vrot.slane %v665, 2
  %v667 = vadd.f32 %v665, %v666
  %v668 = vrot.slane %v667, 1
  %v669 = vadd.f32 %v667, %v668
  %v670 = vmul.f32 %v662, 0.125
  %v671 = vmul.f32 %v669, 0.125
  %v673 = vperm.slane %v102, 0
  %vm677 = vcmask 1041409
  %v678 = vsel %vm677, %v671, %v670
  %v679 = vsel %vm140, %v678, 0
  %681 = vmatpush.msra.mxu0 0.0
  %682 = vmatpush.msra.mxu0 0.0
  %683 = vmatpush.msra.mxu0 0.0
  %684 = vmatpush.msra.mxu0 0.0
  %685 = vmatpush.msra.mxu0 0.0
  %686 = vmatpush.msra.mxu0 0.0
  %687 = vmatpush.msra.mxu0 0.0
  %688 = vmatpush.msra.mxu0 0.0
  %689 = vmatpush.msra.mxu0 0.0
  %690 = vmatpush.msra.mxu0 0.0
  %691 = vmatpush.msra.mxu0 0.0
  %692 = vmatpush.msra.mxu0 0.0
  %693 = vmatpush.msra.mxu0 %v101
  %694 = vmatpush.msra.mxu0 %v100
  %695 = vmatpush.msra.mxu0 %v99
  %696 = vmatpush.msra.mxu0 %v98
  %697 = vmatmul.f32.gmra.mxu0 %v679
  %v698 = vpop.f32.mrf.mxu0
  %v699 = vadd.f32 %v673, %v698
  %700 = vdwg.mxu0
  %vm701 = vcmask 1024
  %702 = vst.msk [vmem:[%s17] sm:$0x3] %vm701, %v699
  // Predicated region
  $region70: #{tpu_custom_call.1} parent=0 // pred_check
    _
  $region71: #{tpu_custom_call.1} parent=0 // pred_check_branch
    %704 = sbr.rel (0) target = $region73
  $region72: #{tpu_custom_call.1} parent=0 // pred_region
    _
  $region73: #{tpu_custom_call.1} parent=0 // pred_fallthru
    _
  // Predicated region
  $region74: #{tpu_custom_call.1} parent=0 // pred_check
    _
  $region75: #{tpu_custom_call.1} parent=0 // pred_check_branch
    %706 = sbr.rel (0) target = $region77
  $region76: #{tpu_custom_call.1} parent=0 // pred_region
    _
  $region77: #{tpu_custom_call.1} parent=0 // pred_fallthru
    _

</llo_original>
